<compile_context>
chip_gen: v5e
topology: v5e:2x2
jax: 0.10.0
libtpu: 0.0.40
codegen_flags: <defaults>
</compile_context>

<pallas_src>
import functools
import math

import jax
import jax.numpy as jnp
from jax.experimental import pallas as pl
from jax.experimental.pallas import tpu as pltpu

_MIB = 1024 * 1024


# ----------------------------------------------------------------------------
# Hardware / tiling helpers
# ----------------------------------------------------------------------------
def _round_up(n, m):
    return -(-n // m) * m


@functools.lru_cache(maxsize=1)
def _vmem_capacity_bytes():
    try:
        info = pltpu.get_tpu_info()
        cap = int(getattr(info, "vmem_capacity_bytes", 0) or 0)
        if cap > 0:
            return cap
    except Exception:
        pass
    return 64 * _MIB  # conservative default (v7x per-core VMEM)


def _block_target_bytes(cap):
    # ~8 MiB f32-equivalent blocks on 128-MiB chips (v5e/v6e), ~6.4 MiB on
    # 64-MiB chips (v7x).
    return min(8 * _MIB, cap // 10)


def _padded_f32_bytes(rows, cols):
    # VMEM footprint of one (rows, cols) f32 slab after (8, 128) tiling.
    return _round_up(max(rows, 1), 8) * _round_up(max(cols, 1), 128) * 4


def _lane_dense_factor(T, C):
    """Fold factor r: view (B, T, C) as (B, T//r, r*C) so rows are lane-dense."""
    if C % 128 == 0:
        return 1
    r = 128 // math.gcd(C, 128)
    if r <= 1 or r > 64 or T % r != 0:
        return 1
    return r


def _pick_time_block(T, C, target_bytes):
    """Largest divisor of T (multiple of 8, or T itself) fitting the target."""
    if _padded_f32_bytes(T, C) <= target_bytes:
        return T
    best = None
    for tt in range(8, T, 8):
        if T % tt == 0 and _padded_f32_bytes(tt, C) <= target_bytes:
            best = tt
    return best if best is not None else T


def _pick_batch_block(B, block_row_bytes, target_bytes, n_time_steps=1,
                      min_total_steps=4):
    """Largest divisor of B whose block fits the target while keeping >= ~4
    total grid steps (pipeline steady state); even batch grids preferred so
    both v7x TensorCores get equal work."""
    min_batch_steps = min(B, max(1, -(-min_total_steps // max(1, n_time_steps))))
    cands = []
    for bt in range(1, B + 1):
        if B % bt:
            continue
        if bt > 1 and bt * block_row_bytes > target_bytes:
            continue
        if (B // bt) < min_batch_steps:
            continue
        cands.append(bt)
    if not cands:
        return 1
    even = [bt for bt in cands if (B // bt) % 2 == 0 or (B // bt) == 1]
    return max(even if even else cands)


def _vmem_limit(bt, tt, cols, in_itemsize, out_itemsize, cap):
    """Double-buffered I/O + ~3 f32-block temporaries + margin, capped at
    ~0.8 * physical VMEM (never request the whole chip)."""
    pad = _round_up(max(tt, 1), 8) * _round_up(max(cols, 1), 128)
    f32_block = bt * pad * 4
    io = 2 * bt * pad * in_itemsize + 2 * bt * pad * out_itemsize
    need = io + 3 * f32_block + 4 * _MIB
    return int(min(int(0.8 * cap), max(32 * _MIB, need)))


# ----------------------------------------------------------------------------
# In-kernel helpers
# ----------------------------------------------------------------------------
def _combine_slots(part, r, C):
    """part: (bt, r*C) f32, lane j holds a partial for channel j % C.
    Returns the lane-wise sum over the r partials of each channel (replicated
    per channel across all r*C lanes) using exact f32 adds + lane rotations."""
    acc = part
    for k in range(1, r):
        acc = acc + pltpu.roll(part, shift=k * C, axis=1)
    return acc


# ----------------------------------------------------------------------------
# Kernels
# ----------------------------------------------------------------------------
def _revin_norm_kernel(x_ref, w_ref, b_ref, y_ref, mean_ref, std_ref, *,
                       eps: float, r: int, C: int):
    """Fused stats (two-pass variance) + normalize + affine over a full-T block.

    x_ref/y_ref: (bt, T//r, r*C)   w_ref/b_ref: (1, r*C)   mean/std: (bt, 1, C)
    """
    x = x_ref[...]
    # Mean: accumulate in f32 without materializing a standalone f32 copy.
    part_mean = jnp.mean(x, axis=1, dtype=jnp.float32)            # (bt, r*C)
    if r > 1:
        mean_t = _combine_slots(part_mean, r, C) * (1.0 / r)
    else:
        mean_t = part_mean
    # Two-pass variance: mean((x - mean)^2), no cancellation.
    d = x.astype(jnp.float32) - mean_t[:, None, :]                 # (bt, Tr, r*C)
    part_var = jnp.mean(d * d, axis=1)                             # (bt, r*C)
    if r > 1:
        var_t = _combine_slots(part_var, r, C) * (1.0 / r)
    else:
        var_t = part_var
    std_t = jnp.sqrt(var_t + eps)
    inv_std = 1.0 / std_t

    w = w_ref[...].astype(jnp.float32)                             # (1, r*C)
    b = b_ref[...].astype(jnp.float32)
    scale = w * inv_std                                            # (bt, r*C)
    # Single f32 FMA per element, cast only at the store.
    y_ref[...] = (d * scale[:, None, :] + b[:, None, :]).astype(y_ref.dtype)
    mean_ref[...] = mean_t[:, None, :C]
    std_ref[...] = std_t[:, None, :C]


def _revin_stats_kernel(x_ref, mean_ref, std_ref, sum_sc, sq_sc, *,
                        eps: float, T: int, r: int, C: int):
    """Long-sequence fallback: accumulate per-(batch, channel) sum / sum-of-
    squares over a tiled time axis (grid axis 1, 'arbitrary')."""
    t = pl.program_id(1)

    @pl.when(t == 0)
    def _():
        sum_sc[...] = jnp.zeros_like(sum_sc)
        sq_sc[...] = jnp.zeros_like(sq_sc)

    xf = x_ref[...].astype(jnp.float32)                            # (bt, tt, r*C)
    sum_sc[...] += jnp.sum(xf, axis=1)
    sq_sc[...] += jnp.sum(xf * xf, axis=1)

    @pl.when(t == pl.num_programs(1) - 1)
    def _():
        s1 = sum_sc[...]
        s2 = sq_sc[...]
        if r > 1:
            s1 = _combine_slots(s1, r, C)
            s2 = _combine_slots(s2, r, C)
        mean = s1[:, :C] / T
        var = jnp.maximum(s2[:, :C] / T - mean * mean, 0.0)
        mean_ref[...] = mean[:, None, :]
        std_ref[...] = jnp.sqrt(var + eps)[:, None, :]


def _fma_kernel(x_ref, scale_ref, shift_ref, y_ref):
    """y = x * scale + shift, scale/shift per (batch, channel), f32 compute."""
    scale = scale_ref[...].astype(jnp.float32)                     # (bt, 1, Cr)
    shift = shift_ref[...].astype(jnp.float32)
    y_ref[...] = (x_ref[...].astype(jnp.float32) * scale + shift).astype(y_ref.dtype)


# ----------------------------------------------------------------------------
# Wrappers (pallas_call plumbing)
# ----------------------------------------------------------------------------
def _apply_scale_shift(x, scale, shift, *, target, cap):
    """Streamed y = x * scale + shift with scale/shift shaped (B, 1, C)."""
    B, T, C = x.shape
    r = _lane_dense_factor(T, C)
    if r > 1:
        Tr, Cr = T // r, C * r
        x_in = x.reshape(B, Tr, Cr)                 # metadata-only reshape
        scale = jnp.tile(scale, (1, 1, r))          # lane j <-> channel j % C
        shift = jnp.tile(shift, (1, 1, r))
    else:
        Tr, Cr = T, C
        x_in = x

    tt = _pick_time_block(Tr, Cr, target)
    nt = Tr // tt
    bt = _pick_batch_block(B, _padded_f32_bytes(tt, Cr), target, n_time_steps=nt)

    x_spec = pl.BlockSpec((bt, tt, Cr), lambda i, t: (i, t, 0))
    ss_spec = pl.BlockSpec((bt, 1, Cr), lambda i, t: (i, 0, 0))
    cp = pltpu.CompilerParams(
        dimension_semantics=("parallel", "parallel"),
        vmem_limit_bytes=_vmem_limit(bt, tt, Cr, x.dtype.itemsize,
                                     x.dtype.itemsize, cap),
    )
    y = pl.pallas_call(
        _fma_kernel,
        out_shape=jax.ShapeDtypeStruct((B, Tr, Cr), x.dtype),
        grid=(B // bt, nt),
        in_specs=[x_spec, ss_spec, ss_spec],
        out_specs=x_spec,
        compiler_params=cp,
    )(x_in, scale, shift)
    return y.reshape(B, T, C)


def revin_norm(x, weight=None, bias=None, *, eps=1e-5, affine=True,
               block_target_bytes=None):
    """RevIN 'norm': returns (y, mean, stdev); mean/stdev are (B, 1, C) f32."""
    B, T, C = x.shape
    cap = _vmem_capacity_bytes()
    target = int(block_target_bytes) if block_target_bytes else _block_target_bytes(cap)

    if affine and weight is not None:
        w = jnp.asarray(weight, jnp.float32).reshape(1, C)
        b = jnp.asarray(bias, jnp.float32).reshape(1, C)
    else:
        w = jnp.ones((1, C), jnp.float32)
        b = jnp.zeros((1, C), jnp.float32)

    r = _lane_dense_factor(T, C)
    Tr, Cr = T // r, C * r
    row_bytes = _padded_f32_bytes(Tr, Cr)           # padded f32 footprint / row

    if row_bytes <= target:
        # ---- fused single-pass path: stats + apply in one HBM read --------
        x_in = x.reshape(B, Tr, Cr) if r > 1 else x
        w_t = jnp.tile(w, (1, r)) if r > 1 else w
        b_t = jnp.tile(b, (1, r)) if r > 1 else b

        bt = _pick_batch_block(B, row_bytes, target, n_time_steps=1)
        x_spec = pl.BlockSpec((bt, Tr, Cr), lambda i: (i, 0, 0))
        p_spec = pl.BlockSpec((1, Cr), lambda i: (0, 0))
        s_spec = pl.BlockSpec((bt, 1, C), lambda i: (i, 0, 0))
        cp = pltpu.CompilerParams(
            dimension_semantics=("parallel",),
            vmem_limit_bytes=_vmem_limit(bt, Tr, Cr, x.dtype.itemsize,
                                         x.dtype.itemsize, cap),
        )
        y, mean, std = pl.pallas_call(
            functools.partial(_revin_norm_kernel, eps=eps, r=r, C=C),
            out_shape=(
                jax.ShapeDtypeStruct((B, Tr, Cr), x.dtype),
                jax.ShapeDtypeStruct((B, 1, C), jnp.float32),
                jax.ShapeDtypeStruct((B, 1, C), jnp.float32),
            ),
            grid=(B // bt,),
            in_specs=[x_spec, p_spec, p_spec],
            out_specs=(x_spec, s_spec, s_spec),
            compiler_params=cp,
        )(x_in, w_t, b_t)
        return y.reshape(B, T, C), mean, std

    # ---- long-sequence fallback: tiled stats pass, then elementwise apply --
    x_in = x.reshape(B, Tr, Cr) if r > 1 else x
    tt = _pick_time_block(Tr, Cr, target)
    nt = Tr // tt
    bt = _pick_batch_block(B, _padded_f32_bytes(tt, Cr), target, n_time_steps=nt)

    x_spec = pl.BlockSpec((bt, tt, Cr), lambda i, t: (i, t, 0))
    s_spec = pl.BlockSpec((bt, 1, C), lambda i, t: (i, 0, 0))
    cp = pltpu.CompilerParams(
        dimension_semantics=("parallel", "arbitrary"),
        vmem_limit_bytes=_vmem_limit(bt, tt, Cr, x.dtype.itemsize, 4, cap),
    )
    mean, std = pl.pallas_call(
        functools.partial(_revin_stats_kernel, eps=eps, T=T, r=r, C=C),
        out_shape=(jax.ShapeDtypeStruct((B, 1, C), jnp.float32),
                   jax.ShapeDtypeStruct((B, 1, C), jnp.float32)),
        grid=(B // bt, nt),
        in_specs=[x_spec],
        out_specs=(s_spec, s_spec),
        scratch_shapes=[pltpu.VMEM((bt, Cr), jnp.float32),
                        pltpu.VMEM((bt, Cr), jnp.float32)],
        compiler_params=cp,
    )(x_in)

    scale = w.reshape(1, 1, C) / std                      # (B, 1, C), tiny XLA op
    shift = b.reshape(1, 1, C) - mean * scale
    y = _apply_scale_shift(x, scale, shift, target=target, cap=cap)
    return y, mean, std


def revin_denorm(x, mean, std, weight=None, bias=None, *, eps=1e-5, affine=True,
                 block_target_bytes=None):
    B, T, C = x.shape
    cap = _vmem_capacity_bytes()
    target = int(block_target_bytes) if block_target_bytes else _block_target_bytes(cap)

    mean = jnp.asarray(mean, jnp.float32).reshape(B, 1, C)
    std = jnp.asarray(std, jnp.float32).reshape(B, 1, C)
    if affine and weight is not None:
        w = jnp.asarray(weight, jnp.float32).reshape(1, 1, C)
        b = jnp.asarray(bias, jnp.float32).reshape(1, 1, C)
        scale = std / (w + eps * eps)
        shift = mean - b * scale
    else:
        scale = std
        shift = mean
    return _apply_scale_shift(x, scale, shift, target=target, cap=cap)


class RevIN:
    """JAX/Pallas port of the PyTorch RevIN module (stateful statistics)."""

    def __init__(self, num_features: int, eps=1e-5, affine=True):
        self.num_features = num_features
        self.eps = eps
        self.affine = affine
        if affine:
            # Deterministic init, matching nn.Parameter(torch.ones/zeros(C)).
            self.affine_weight = jnp.ones((num_features,), jnp.float32)
            self.affine_bias = jnp.zeros((num_features,), jnp.float32)
        else:
            self.affine_weight = None
            self.affine_bias = None
        self.mean = None
        self.stdev = None

    def __call__(self, x, mode: str):
        if mode == 'norm':
            y, self.mean, self.stdev = revin_norm(
                x, self.affine_weight, self.affine_bias,
                eps=self.eps, affine=self.affine)
            return y
        elif mode == 'denorm':
            return revin_denorm(
                x, self.mean, self.stdev, self.affine_weight, self.affine_bias,
                eps=self.eps, affine=self.affine)
        else:
            raise NotImplementedError


# ----------------------------------------------------------------------------
# Pure-JAX reference for sanity checking
# ----------------------------------------------------------------------------
def _ref_norm(x, w, b, eps, affine=True):
    mean = jnp.mean(x, axis=1, keepdims=True)
    var = jnp.mean((x - mean) ** 2, axis=1, keepdims=True)
    std = jnp.sqrt(var + eps)
    y = (x - mean) / std
    if affine:
        y = y * w + b
    return y, mean, std


def _ref_denorm(x, mean, std, w, b, eps, affine=True):
    if affine:
        x = (x - b) / (w + eps * eps)
    return x * std + mean


if __name__ == "__main__":
    key = jax.random.PRNGKey(0)
    k1, k2, k3, k4 = jax.random.split(key, 4)

    # --- 1. standard layout (tiny T, lane-dense fold not applicable) --------
    B, T, C = 2, 8, 4
    x = jax.random.normal(k1, (B, T, C), dtype=jnp.float32) * 3.0 + 1.5

    layer = RevIN(num_features=C, eps=1e-5, affine=True)
    y = jax.block_until_ready(layer(x, 'norm'))
    x_rec = jax.block_until_ready(layer(y, 'denorm'))

    y_ref, m_ref, s_ref = _ref_norm(x, layer.affine_weight, layer.affine_bias,
                                    layer.eps)
    x_rec_ref = _ref_denorm(y_ref, m_ref, s_ref, layer.affine_weight,
                            layer.affine_bias, layer.eps)
    assert jnp.allclose(y, y_ref, atol=1e-5, rtol=1e-5)
    assert jnp.allclose(layer.mean, m_ref, atol=1e-5, rtol=1e-5)
    assert jnp.allclose(layer.stdev, s_ref, atol=1e-5, rtol=1e-5)
    assert jnp.allclose(x_rec, x_rec_ref, atol=1e-5, rtol=1e-5)
    assert jnp.allclose(x_rec, x, atol=1e-4, rtol=1e-4)

    layer_na = RevIN(num_features=C, eps=1e-5, affine=False)
    y_na = jax.block_until_ready(layer_na(x, 'norm'))
    x_na = jax.block_until_ready(layer_na(y_na, 'denorm'))
    y_na_ref, _, _ = _ref_norm(x, None, None, 1e-5, affine=False)
    assert jnp.allclose(y_na, y_na_ref, atol=1e-5, rtol=1e-5)
    assert jnp.allclose(x_na, x, atol=1e-4, rtol=1e-4)

    # --- 2. lane-dense path (C=4 folded onto 128 lanes) ---------------------
    B2, T2, C2 = 4, 128, 4
    x2 = jax.random.normal(k2, (B2, T2, C2), dtype=jnp.float32) * 2.0 - 0.7
    layer2 = RevIN(num_features=C2, eps=1e-5, affine=True)
    y2 = jax.block_until_ready(layer2(x2, 'norm'))
    x2_rec = jax.block_until_ready(layer2(y2, 'denorm'))
    y2_ref, m2_ref, s2_ref = _ref_norm(x2, layer2.affine_weight,
                                       layer2.affine_bias, 1e-5)
    assert jnp.allclose(y2, y2_ref, atol=1e-5, rtol=1e-5)
    assert jnp.allclose(layer2.mean, m2_ref, atol=1e-5, rtol=1e-5)
    assert jnp.allclose(layer2.stdev, s2_ref, atol=1e-5, rtol=1e-5)
    assert jnp.allclose(x2_rec, x2, atol=1e-4, rtol=1e-4)

    # --- 3. long-sequence fallback (forced tiny block target) ---------------
    B3, T3, C3 = 2, 40, 4
    x3 = jax.random.normal(k3, (B3, T3, C3), dtype=jnp.float32) * 3.0 + 1.5
    w3 = jnp.ones((C3,), jnp.float32)
    b3 = jnp.zeros((C3,), jnp.float32)
    y3, m3, s3 = revin_norm(x3, w3, b3, eps=1e-5, affine=True,
                            block_target_bytes=8192)
    y3 = jax.block_until_ready(y3)
    x3_rec = jax.block_until_ready(
        revin_denorm(y3, m3, s3, w3, b3, eps=1e-5, affine=True,
                     block_target_bytes=8192))
    y3_ref, m3_ref, s3_ref = _ref_norm(x3, w3, b3, 1e-5)
    assert jnp.allclose(y3, y3_ref, atol=1e-4, rtol=1e-4)
    assert jnp.allclose(m3, m3_ref, atol=1e-4, rtol=1e-4)
    assert jnp.allclose(s3, s3_ref, atol=1e-4, rtol=1e-4)
    assert jnp.allclose(x3_rec, x3, atol=1e-4, rtol=1e-4)

    # --- 4. bf16 inputs (lane-dense; f32 stats / f32 FMA inside) ------------
    B4, T4, C4 = 4, 128, 8
    x4 = (jax.random.normal(k4, (B4, T4, C4), dtype=jnp.float32) * 3.0 + 1.5
          ).astype(jnp.bfloat16)
    layer4 = RevIN(num_features=C4, eps=1e-5, affine=True)
    y4 = jax.block_until_ready(layer4(x4, 'norm'))
    x4_rec = jax.block_until_ready(layer4(y4, 'denorm'))
    y4_ref, m4_ref, s4_ref = _ref_norm(x4.astype(jnp.float32),
                                       layer4.affine_weight,
                                       layer4.affine_bias, 1e-5)
    assert jnp.allclose(y4.astype(jnp.float32), y4_ref, atol=5e-2)
    assert jnp.allclose(layer4.mean, m4_ref, atol=1e-3)
    assert jnp.allclose(layer4.stdev, s4_ref, atol=1e-3)
    assert jnp.allclose(x4_rec.astype(jnp.float32), x4.astype(jnp.float32),
                        atol=0.25)

    print("KERNEL_OK")
</pallas_src>

<mosaic_0001>
module attributes {stable_mosaic.version = 11 : i64} {
  func.func @_revin_norm_kernel(%arg0: i32, %arg1: memref<1x8x4xf32, #tpu.memory_space<vmem>>, %arg2: memref<1x4xf32, #tpu.memory_space<vmem>>, %arg3: memref<1x4xf32, #tpu.memory_space<vmem>>, %arg4: memref<1x8x4xf32, #tpu.memory_space<vmem>>, %arg5: memref<1x1x4xf32, #tpu.memory_space<vmem>>, %arg6: memref<1x1x4xf32, #tpu.memory_space<vmem>>) attributes {dimension_semantics = [#tpu.dimension_semantics<parallel>], iteration_bounds = array<i64: 2>, scalar_prefetch = 0 : i64, scratch_operands = 0 : i64, tpu.core_type = #tpu.core_type<tc>, window_params = [{transform_indices = @transform_0, window_bounds = array<i64: 1, 8, 4>}, {pipeline_mode = #tpu.pipeline_mode<synchronous>, transform_indices = @transform_1, window_bounds = array<i64: 1, 4>}, {pipeline_mode = #tpu.pipeline_mode<synchronous>, transform_indices = @transform_2, window_bounds = array<i64: 1, 4>}, {transform_indices = @transform_3, window_bounds = array<i64: 1, 8, 4>}, {transform_indices = @transform_4, window_bounds = array<i64: 1, 1, 4>}, {transform_indices = @transform_5, window_bounds = array<i64: 1, 1, 4>}]} {
    %c0 = arith.constant 0 : index
    %c0_0 = arith.constant 0 : index
    %c0_1 = arith.constant 0 : index
    %0 = vector.load %arg1[%c0, %c0_0, %c0_1] : memref<1x8x4xf32, #tpu.memory_space<vmem>>, vector<1x8x4xf32>
    %cst = arith.constant dense<0.000000e+00> : vector<1x4xf32>
    %1 = vector.multi_reduction <add>, %0, %cst [1] : vector<1x8x4xf32> to vector<1x4xf32>
    %cst_2 = arith.constant 8.000000e+00 : f32
    %2 = vector.broadcast %cst_2 : f32 to vector<1x4xf32>
    %3 = arith.divf %1, %2 : vector<1x4xf32>
    %4 = vector.shape_cast %3 : vector<1x4xf32> to vector<1x1x4xf32>
    %5 = vector.broadcast %4 : vector<1x1x4xf32> to vector<1x8x4xf32>
    %6 = arith.subf %0, %5 : vector<1x8x4xf32>
    %7 = arith.mulf %6, %6 : vector<1x8x4xf32>
    %cst_3 = arith.constant dense<0.000000e+00> : vector<1x4xf32>
    %8 = vector.multi_reduction <add>, %7, %cst_3 [1] : vector<1x8x4xf32> to vector<1x4xf32>
    %cst_4 = arith.constant 8.000000e+00 : f32
    %9 = vector.broadcast %cst_4 : f32 to vector<1x4xf32>
    %10 = arith.divf %8, %9 : vector<1x4xf32>
    %cst_5 = arith.constant 9.99999974E-6 : f32
    %11 = vector.broadcast %cst_5 : f32 to vector<1x4xf32>
    %12 = arith.addf %10, %11 : vector<1x4xf32>
    %13 = math.sqrt %12 : vector<1x4xf32>
    %cst_6 = arith.constant 1.000000e+00 : f32
    %14 = vector.broadcast %cst_6 : f32 to vector<1x4xf32>
    %15 = arith.divf %14, %13 : vector<1x4xf32>
    %c0_7 = arith.constant 0 : index
    %c0_8 = arith.constant 0 : index
    %16 = vector.load %arg2[%c0_7, %c0_8] : memref<1x4xf32, #tpu.memory_space<vmem>>, vector<1x4xf32>
    %c0_9 = arith.constant 0 : index
    %c0_10 = arith.constant 0 : index
    %17 = vector.load %arg3[%c0_9, %c0_10] : memref<1x4xf32, #tpu.memory_space<vmem>>, vector<1x4xf32>
    %18 = arith.mulf %16, %15 : vector<1x4xf32>
    %19 = vector.shape_cast %18 : vector<1x4xf32> to vector<1x1x4xf32>
    %20 = vector.broadcast %19 : vector<1x1x4xf32> to vector<1x8x4xf32>
    %21 = arith.mulf %6, %20 : vector<1x8x4xf32>
    %22 = vector.shape_cast %17 : vector<1x4xf32> to vector<1x1x4xf32>
    %23 = vector.broadcast %22 : vector<1x1x4xf32> to vector<1x8x4xf32>
    %24 = arith.addf %21, %23 : vector<1x8x4xf32>
    %c0_11 = arith.constant 0 : index
    %c0_12 = arith.constant 0 : index
    %c0_13 = arith.constant 0 : index
    %25 = vector.load %arg4[%c0_11, %c0_12, %c0_13] : memref<1x8x4xf32, #tpu.memory_space<vmem>>, vector<1x8x4xf32>
    tpu.vector_store %arg4[%c0_11, %c0_12, %c0_13], %24 {strides = array<i32>} : memref<1x8x4xf32, #tpu.memory_space<vmem>>, vector<1x8x4xf32>,
    %26 = vector.shape_cast %3 : vector<1x4xf32> to vector<1x1x4xf32>
    %c0_14 = arith.constant 0 : index
    %c0_15 = arith.constant 0 : index
    %c0_16 = arith.constant 0 : index
    %27 = vector.load %arg5[%c0_14, %c0_15, %c0_16] : memref<1x1x4xf32, #tpu.memory_space<vmem>>, vector<1x1x4xf32>
    tpu.vector_store %arg5[%c0_14, %c0_15, %c0_16], %26 {strides = array<i32>} : memref<1x1x4xf32, #tpu.memory_space<vmem>>, vector<1x1x4xf32>,
    %28 = vector.shape_cast %13 : vector<1x4xf32> to vector<1x1x4xf32>
    %c0_17 = arith.constant 0 : index
    %c0_18 = arith.constant 0 : index
    %c0_19 = arith.constant 0 : index
    %29 = vector.load %arg6[%c0_17, %c0_18, %c0_19] : memref<1x1x4xf32, #tpu.memory_space<vmem>>, vector<1x1x4xf32>
    tpu.vector_store %arg6[%c0_17, %c0_18, %c0_19], %28 {strides = array<i32>} : memref<1x1x4xf32, #tpu.memory_space<vmem>>, vector<1x1x4xf32>,
    return
  }
  func.func @transform_0(%arg0: i32) -> (i32, i32, i32) {
    %c0_i32 = arith.constant 0 : i32
    %c0_i32_0 = arith.constant 0 : i32
    %c0_i32_1 = arith.constant 0 : i32
    return %arg0, %c0_i32, %c0_i32_0 : i32, i32, i32
  }
  func.func @transform_1(%arg0: i32) -> (i32, i32) {
    %c0_i32 = arith.constant 0 : i32
    %c0_i32_0 = arith.constant 0 : i32
    %c0_i32_1 = arith.constant 0 : i32
    return %c0_i32, %c0_i32_0 : i32, i32
  }
  func.func @transform_2(%arg0: i32) -> (i32, i32) {
    %c0_i32 = arith.constant 0 : i32
    %c0_i32_0 = arith.constant 0 : i32
    %c0_i32_1 = arith.constant 0 : i32
    return %c0_i32, %c0_i32_0 : i32, i32
  }
  func.func @transform_3(%arg0: i32) -> (i32, i32, i32) {
    %c0_i32 = arith.constant 0 : i32
    %c0_i32_0 = arith.constant 0 : i32
    %c0_i32_1 = arith.constant 0 : i32
    return %arg0, %c0_i32, %c0_i32_0 : i32, i32, i32
  }
  func.func @transform_4(%arg0: i32) -> (i32, i32, i32) {
    %c0_i32 = arith.constant 0 : i32
    %c0_i32_0 = arith.constant 0 : i32
    %c0_i32_1 = arith.constant 0 : i32
    return %arg0, %c0_i32, %c0_i32_0 : i32, i32, i32
  }
  func.func @transform_5(%arg0: i32) -> (i32, i32, i32) {
    %c0_i32 = arith.constant 0 : i32
    %c0_i32_0 = arith.constant 0 : i32
    %c0_i32_1 = arith.constant 0 : i32
    return %arg0, %c0_i32, %c0_i32_0 : i32, i32, i32
  }
}

</mosaic_0001>

<llo_original>
// kernel: tpu_custom_call.1
$region0: #{tpu_custom_call.1}
  #allocation0 [shape = 'u32[]', space=smem, size = 0x4, offset = 0x4, fixed_abs, tag = 'smem constant byte address 0x4 - core index']
  #allocation1 [shape = 'u32[72,128]{1,0:T(1,128)}', space=vmem, size = 0x9000, scoped, tag = 'internal scratch']
  %s0 = inlined_call_operand.vmem [shape: f32[2,8,4], index: 0, kind: input, shape index: {}]
  %s1 = inlined_call_operand.vmem [shape: f32[1,4], index: 1, kind: input, shape index: {}]
  %s2 = inlined_call_operand.vmem [shape: f32[1,4], index: 2, kind: input, shape index: {}]
  %s3 = inlined_call_operand.vmem [shape: f32[2,8,4], index: 3, kind: output, shape index: {0}]
  %s4 = inlined_call_operand.hbm [shape: f32[2,1,4], index: 4, kind: output, shape index: {1}]
  %s5 = inlined_call_operand.hbm [shape: f32[2,1,4], index: 5, kind: output, shape index: {2}]
  %6 = xla_tuple %s3, %s4, %s5
  %s7 = sld [smem:[#allocation0]]
  $region61: #{tpu_custom_call.1} parent=0
    _
  %s9 = ssub.s32 1, %s7
  %s10 = scalar_select 0, %s9, %s7
  $region1: #{tpu_custom_call.1} parent=0
    #allocation2 [shape = 'u8[1024]{0}', space=vmem, size = 0x400, scoped, tag = 'output window, operand 1']
    #allocation3 [shape = 's32[2]{0}', space=sflag, size = 0x8, scoped, tag = 'scoped memory for tpu_custom_call.1']
    #allocation4 [shape = 'u8[1024]{0}', space=vmem, size = 0x400, scoped, tag = 'output window, operand 2']
    #allocation5 [shape = 's32[2]{0}', space=sflag, size = 0x8, scoped, tag = 'scoped memory for tpu_custom_call.1']
    %11 = vsyncpa [#allocation3], 0
    %s12 = scalar_lea.sflag [#allocation3], 1
    %13 = vsyncpa %s12, 0
    %14 = vsyncpa [#allocation5], 0
    %s15 = scalar_lea.sflag [#allocation5], 1
    %16 = vsyncpa %s15, 0
    loop: start=0, step=1, limit=4
    $region2: #{tpu_custom_call.1} parent=1 // loop_pre_header
      _
    $region3: #{tpu_custom_call.1} parent=1 // loop_header
      %s18 = sphi 0, %s22
      %p19 = scmp.ge.s32.totalorder %s18, 4
      %s28 = sphi 0, %s30
      %s31 = sphi 0, %s28
      %s32 = sphi 0, %s31
      %s48 = sphi 0, %s32
      %s52 = sphi 0, %s52
      %s54 = sphi 0, %s52
      %s55 = sphi 0, %s54
      %s69 = sphi 0, %s55
      %s73 = sphi 0, %s73
      %s75 = sphi 0, %s73
      %s76 = sphi 0, %s75
      %s90 = sphi 0, %s76
      %s96 = sphi 0, %s98
      %s99 = sphi 0, %s96
      %s100 = sphi 0, %s99
      %s116 = sphi 0, %s100
      %s122 = sphi 0, %s124
      %s125 = sphi 0, %s122
      %s126 = sphi 0, %s125
      %s142 = sphi 0, %s126
      %s148 = sphi 0, %s150
      %s151 = sphi 0, %s148
      %s152 = sphi 0, %s151
      %s168 = sphi 0, %s152
    $region4: #{tpu_custom_call.1} parent=1 // loop_header_branch
      %21 = sbr.rel (%p19) target = $region8
    $region5: #{tpu_custom_call.1} parent=1 // loop_body
      %s23 = ssub.s32 %s18, 1
      %s24 = ssub.s32 %s18, 2
      %s25 = sadd.s32 %s18, 1
      %s26 = ssub.s32 %s18, %s25
      %p27 = scmp.eq.s32.totalorder %s26, 0
      %s29 = sadd.s32 %s28, 1
      %s30 = scalar_select %p27, %s28, %s29
      %p33 = pneg %p27
      %p34 = scmp.eq.s32.totalorder %s18, 1
      %p35 = por %p33, %p34
      %p36 = scmp.ne.s32.totalorder %s28, %s31
      %p37 = scmp.eq.s32.totalorder %s18, 0
      %p38 = por %p36, %p37
      %p39 = scmp.ne.s32.totalorder %s28, %s31
      %p40 = scmp.eq.s32.totalorder %s23, 1
      %p41 = por %p39, %p40
      %p42 = scmp.ne.s32.totalorder %s31, %s32
      %p43 = scmp.eq.s32.totalorder %s23, 0
      %p44 = por %p42, %p43
      %p45 = scmp.ne.s32.totalorder %s31, %s32
      %p46 = scmp.eq.s32.totalorder %s24, 1
      %p47 = por %p45, %p46
      %p49 = scmp.ne.s32.totalorder %s32, %s48
      %p50 = scmp.eq.s32.totalorder %s24, 0
      %p51 = por %p49, %p50
      %s53 = sadd.s32 %s52, 1
      %p56 = scmp.eq.s32.totalorder %s18, 1
      %p57 = scmp.ne.s32.totalorder %s52, %s54
      %p58 = scmp.eq.s32.totalorder %s18, 0
      %p59 = por %p57, %p58
      %p60 = scmp.ne.s32.totalorder %s52, %s54
      %p61 = scmp.eq.s32.totalorder %s23, 1
      %p62 = por %p60, %p61
      %p63 = scmp.ne.s32.totalorder %s54, %s55
      %p64 = scmp.eq.s32.totalorder %s23, 0
      %p65 = por %p63, %p64
      %p66 = scmp.ne.s32.totalorder %s54, %s55
      %p67 = scmp.eq.s32.totalorder %s24, 1
      %p68 = por %p66, %p67
      %p70 = scmp.ne.s32.totalorder %s55, %s69
      %p71 = scmp.eq.s32.totalorder %s24, 0
      %p72 = por %p70, %p71
      %s74 = sadd.s32 %s73, 1
      %p77 = scmp.eq.s32.totalorder %s18, 1
      %p78 = scmp.ne.s32.totalorder %s73, %s75
      %p79 = scmp.eq.s32.totalorder %s18, 0
      %p80 = por %p78, %p79
      %p81 = scmp.ne.s32.totalorder %s73, %s75
      %p82 = scmp.eq.s32.totalorder %s23, 1
      %p83 = por %p81, %p82
      %p84 = scmp.ne.s32.totalorder %s75, %s76
      %p85 = scmp.eq.s32.totalorder %s23, 0
      %p86 = por %p84, %p85
      %p87 = scmp.ne.s32.totalorder %s75, %s76
      %p88 = scmp.eq.s32.totalorder %s24, 1
      %p89 = por %p87, %p88
      %p91 = scmp.ne.s32.totalorder %s76, %s90
      %p92 = scmp.eq.s32.totalorder %s24, 0
      %p93 = por %p91, %p92
      %s94 = ssub.s32 %s18, %s25
      %p95 = scmp.eq.s32.totalorder %s94, 0
      %s97 = sadd.s32 %s96, 1
      %s98 = scalar_select %p95, %s96, %s97
      %p101 = pneg %p95
      %p102 = scmp.eq.s32.totalorder %s18, 1
      %p103 = por %p101, %p102
      %p104 = scmp.ne.s32.totalorder %s96, %s99
      %p105 = scmp.eq.s32.totalorder %s18, 0
      %p106 = por %p104, %p105
      %p107 = scmp.ne.s32.totalorder %s96, %s99
      %p108 = scmp.eq.s32.totalorder %s23, 1
      %p109 = por %p107, %p108
      %p110 = scmp.ne.s32.totalorder %s99, %s100
      %p111 = scmp.eq.s32.totalorder %s23, 0
      %p112 = por %p110, %p111
      %p113 = scmp.ne.s32.totalorder %s99, %s100
      %p114 = scmp.eq.s32.totalorder %s24, 1
      %p115 = por %p113, %p114
      %p117 = scmp.ne.s32.totalorder %s100, %s116
      %p118 = scmp.eq.s32.totalorder %s24, 0
      %p119 = por %p117, %p118
      %s120 = ssub.s32 %s18, %s25
      %p121 = scmp.eq.s32.totalorder %s120, 0
      %s123 = sadd.s32 %s122, 1
      %s124 = scalar_select %p121, %s122, %s123
      %p127 = pneg %p121
      %p128 = scmp.eq.s32.totalorder %s18, 1
      %p129 = por %p127, %p128
      %p130 = scmp.ne.s32.totalorder %s122, %s125
      %p131 = scmp.eq.s32.totalorder %s18, 0
      %p132 = por %p130, %p131
      %p133 = scmp.ne.s32.totalorder %s122, %s125
      %p134 = scmp.eq.s32.totalorder %s23, 1
      %p135 = por %p133, %p134
      %p136 = scmp.ne.s32.totalorder %s125, %s126
      %p137 = scmp.eq.s32.totalorder %s23, 0
      %p138 = por %p136, %p137
      %p139 = scmp.ne.s32.totalorder %s125, %s126
      %p140 = scmp.eq.s32.totalorder %s24, 1
      %p141 = por %p139, %p140
      %p143 = scmp.ne.s32.totalorder %s126, %s142
      %p144 = scmp.eq.s32.totalorder %s24, 0
      %p145 = por %p143, %p144
      %s146 = ssub.s32 %s18, %s25
      %p147 = scmp.eq.s32.totalorder %s146, 0
      %s149 = sadd.s32 %s148, 1
      %s150 = scalar_select %p147, %s148, %s149
      %p153 = pneg %p147
      %p154 = scmp.eq.s32.totalorder %s18, 1
      %p155 = por %p153, %p154
      %p156 = scmp.ne.s32.totalorder %s148, %s151
      %p157 = scmp.eq.s32.totalorder %s18, 0
      %p158 = por %p156, %p157
      %p159 = scmp.ne.s32.totalorder %s148, %s151
      %p160 = scmp.eq.s32.totalorder %s23, 1
      %p161 = por %p159, %p160
      %p162 = scmp.ne.s32.totalorder %s151, %s152
      %p163 = scmp.eq.s32.totalorder %s23, 0
      %p164 = por %p162, %p163
      %p165 = scmp.ne.s32.totalorder %s151, %s152
      %p166 = scmp.eq.s32.totalorder %s24, 1
      %p167 = por %p165, %p166
      %p169 = scmp.ne.s32.totalorder %s152, %s168
      %p170 = scmp.eq.s32.totalorder %s24, 0
      %p171 = por %p169, %p170
      %p172 = scmp.le.s32.totalorder 1, %s18
      %p173 = scmp.lt.s32.totalorder %s18, 3
      %p174 = pnand %p172, %p173
      %p175 = pneg %p174
      // Predicated region
      $region9: #{tpu_custom_call.1} parent=5 // pred_check
        _
      $region10: #{tpu_custom_call.1} parent=5 // pred_check_branch
        %177 = sbr.rel (%p174) target = $region12
      $region11: #{tpu_custom_call.1} parent=5 // pred_region
        %s178 = ssub.s32 %s18, 1
        // Predicated region
        $region13: #{tpu_custom_call.1} parent=11 // pred_check
          %p179 = pneg %p65
        $region14: #{tpu_custom_call.1} parent=11 // pred_check_branch
          %181 = sbr.rel (%p179) target = $region16
        $region15: #{tpu_custom_call.1} parent=11 // pred_region
          _
        $region16: #{tpu_custom_call.1} parent=11 // pred_fallthru
          _
        // Predicated region
        $region17: #{tpu_custom_call.1} parent=11 // pred_check
          %p182 = pneg %p86
        $region18: #{tpu_custom_call.1} parent=11 // pred_check_branch
          %184 = sbr.rel (%p182) target = $region20
        $region19: #{tpu_custom_call.1} parent=11 // pred_region
          _
        $region20: #{tpu_custom_call.1} parent=11 // pred_fallthru
          _
      $region12: #{tpu_custom_call.1} parent=5 // pred_fallthru
        _
      %p185 = scmp.lt.s32.totalorder %s18, 2
      // Predicated region
      $region21: #{tpu_custom_call.1} parent=5 // pred_check
        %p186 = pneg %p185
      $region22: #{tpu_custom_call.1} parent=5 // pred_check_branch
        %188 = sbr.rel (%p186) target = $region24
      $region23: #{tpu_custom_call.1} parent=5 // pred_region
        // Predicated region
        $region25: #{tpu_custom_call.1} parent=23 // pred_check
          %p189 = pneg %p38
        $region26: #{tpu_custom_call.1} parent=23 // pred_check_branch
          %191 = sbr.rel (%p189) target = $region28
        $region27: #{tpu_custom_call.1} parent=23 // pred_region
          %p192 = scmp.lt.s32.totalorder %s18, 1
          %s193 = scalar_select %p192, %s18, 1
          %s194 = smul.addr %s193, 8
          %s195 = scalar_lea.vmem %s0, %s194
        $region28: #{tpu_custom_call.1} parent=23 // pred_fallthru
          _
      $region24: #{tpu_custom_call.1} parent=5 // pred_fallthru
        _
      %p196 = scmp.le.s32.totalorder 1, %s18
      %p197 = scmp.lt.s32.totalorder %s18, 3
      %p198 = pnand %p196, %p197
      %p199 = pneg %p198
      // Predicated region
      $region29: #{tpu_custom_call.1} parent=5 // pred_check
        _
      $region30: #{tpu_custom_call.1} parent=5 // pred_check_branch
        %201 = sbr.rel (%p198) target = $region32
      $region31: #{tpu_custom_call.1} parent=5 // pred_region
        %s202 = ssub.s32 %s18, 1
        %p203 = scmp.lt.s32.totalorder %s23, 1
        %s204 = scalar_select %p203, %s23, 1
        %s205 = smul.addr %s204, 8
        %s206 = scalar_lea.vmem %s0, %s205
        %p207 = pneg %p44
        %p208 = pneg %p41
        %p209 = pneg %p65
        %p210 = pneg %p62
        %p211 = pneg %p86
        %p212 = pneg %p83
        %p213 = pneg %p112
        %p214 = pneg %p109
        %p215 = scmp.lt.s32.totalorder %s23, 1
        %s216 = scalar_select %p215, %s23, 1
        %s217 = smul.addr %s216, 8
        %s218 = scalar_lea.vmem %s3, %s217
        %p219 = pneg %p138
        %p220 = pneg %p135
        %s221 = sand.u32 %s125, 1
        %s222 = scalar_lea.sflag [#allocation3], %s221
        %s223 = sand.u32 %s125, 1
        %s224 = scalar_lea.vmem [#allocation2], %s223
        %p225 = pneg %p164
        %p226 = pneg %p161
        %s227 = sand.u32 %s151, 1
        %s228 = scalar_lea.sflag [#allocation5], %s227
        %s229 = sand.u32 %s151, 1
        %s230 = scalar_lea.vmem [#allocation4], %s229
        %p231 = scmp.lt.s32.totalorder %s23, 1
        %s232 = scalar_select %p231, %s23, 1
        %s233 = smul.addr %s232, 8
        %s234 = scalar_lea.vmem %s0, %s233
        %p235 = scmp.lt.s32.totalorder %s23, 1
        %s236 = scalar_select %p235, %s23, 1
        %s237 = smul.addr %s236, 8
        %s238 = scalar_lea.vmem %s3, %s237
        %v239 = vld [vmem:[%s234] sm:$0xff]
        %vm240 = vcmask 31744
        %v241 = vsel %vm240, %v239, 0.0
        %v242 = vrot.slane %v241, 4
        %v243 = vadd.f32 %v241, %v242
        %v244 = vrot.slane %v243, 2
        %v245 = vadd.f32 %v243, %v244
        %v246 = vrot.slane %v245, 1
        %v247 = vadd.f32 %v245, %v246
        %v248 = vrcp.pop 8.0
        %v249 = vmul.f32 8.0, %v248
        %v250 = vsub.f32 1.0, %v249
        %v251 = vmul.f32 %v248, %v250
        %v252 = vadd.f32 %v248, %v251
        %vm253 = vweird.f32 %v248
        %v254 = vsel %vm253, %v248, %v252
        %v255 = vmul.f32 %v247, %v254
        %v256 = vsub.f32 %v239, %v255
        %v257 = vmul.f32 %v256, %v256
        %v258 = vsel %vm240, %v257, 0.0
        %v259 = vrot.slane %v258, 4
        %v260 = vadd.f32 %v258, %v259
        %v261 = vrot.slane %v260, 2
        %v262 = vadd.f32 %v260, %v261
        %v263 = vrot.slane %v262, 1
        %v264 = vadd.f32 %v262, %v263
        %v265 = vmul.f32 %v264, %v254
        %v266 = vadd.f32 %v265, 1e-05
        %v267 = vrsqrt.pop %v266
        %v268 = vmul.f32 %v267, %v266
        %v269 = vmul.f32 %v268, %v267
        %v270 = vmul.f32 0.5, %v269
        %v271 = vsub.f32 1.5, %v270
        %v272 = vmul.f32 %v267, %v271
        %v273 = vmul.f32 %v266, %v272
        %vm274 = vcmp.eq.f32.partialorder %v266, inf
        %v275 = vsel %vm274, %v266, %v273
        %vm276 = vcmp.eq.f32.partialorder %v266, 0.0
        %v277 = vand.u32 %v266, 2147483648
        %v278 = vsel %vm276, %v277, %v275
        %v279 = vrcp.pop %v278
        %v280 = vmul.f32 %v278, %v279
        %v281 = vsub.f32 1.0, %v280
        %v282 = vmul.f32 %v279, %v281
        %v283 = vadd.f32 %v279, %v282
        %vm284 = vweird.f32 %v278
        %vm285 = vweird.f32 %v279
        %vm286 = vmor %vm284, %vm285
        %v287 = vsel %vm286, %v279, %v283
        %v288 = vand.u32 2147483647, %v278
        %vm289 = vcmp.eq.f32.partialorder %v288, 8.507059e+37
        %v290 = vand.u32 %v278, 2147483648
        %v291 = vor.u32 1.1754944e-38, %v290
        %v292 = vsel %vm289, %v291, %v287
        %v293 = vmul.f32 1.0, %v292
        %v294 = vld [vmem:[%s1] sm:$0x1]
        %v295 = vld [vmem:[%s2] sm:$0x1]
        %v296 = vmul.f32 %v294, %v293
        %v298 = vperm.slane %v296, 0
        %v300 = vmul.f32 %v256, %v298
        %v302 = vperm.slane %v295, 0
        %v304 = vadd.f32 %v300, %v302
        %305 = vst.msk [vmem:[%s238] sm:$0xff] %vm240, %v304
        %vm306 = vcmask 24576
        %307 = vst.msk [vmem:[%s224] sm:$0x1] %vm306, %v255
        %308 = vst.msk [vmem:[%s230] sm:$0x1] %vm306, %v278
        %p309 = scmp.lt.s32.totalorder %s23, 1
        %s310 = scalar_select %p309, %s23, 1
        %s311 = smul.addr %s310, 8
        %s312 = scalar_lea.vmem %s3, %s311
        %s313 = sand.u32 %s125, 1
        %s314 = scalar_lea.sflag [#allocation3], %s313
        %s315 = sand.u32 %s125, 1
        %s316 = scalar_lea.vmem [#allocation2], %s315
        %s317 = sand.u32 %s151, 1
        %s318 = scalar_lea.sflag [#allocation5], %s317
        %s319 = sand.u32 %s151, 1
        %s320 = scalar_lea.vmem [#allocation4], %s319
        // Predicated region
        $region33: #{tpu_custom_call.1} parent=31 // pred_check
          %p321 = pneg %p109
        $region34: #{tpu_custom_call.1} parent=31 // pred_check_branch
          %323 = sbr.rel (%p321) target = $region36
        $region35: #{tpu_custom_call.1} parent=31 // pred_region
          _
        $region36: #{tpu_custom_call.1} parent=31 // pred_fallthru
          _
        // Predicated region
        $region37: #{tpu_custom_call.1} parent=31 // pred_check
          %p324 = pneg %p135
        $region38: #{tpu_custom_call.1} parent=31 // pred_check_branch
          %326 = sbr.rel (%p324) target = $region40
        $region39: #{tpu_custom_call.1} parent=31 // pred_region
          %328 = vsyncadd %s314, 0
          %s329 = scalar_lea.hbm %s4, %s23
          %s331 = sshll.u32 %s316, 4
          %s332 = int_to_ptr.vmem [resolvable:$true] %s331
          %s333 = sshll.u32 %s329, 4
          %s334 = int_to_ptr.hbm [resolvable:$true] %s333
          %336 = dma.vmem_to_hbm [thread:$0]  %s332, 16, %s334, %s314
        $region40: #{tpu_custom_call.1} parent=31 // pred_fallthru
          _
        // Predicated region
        $region41: #{tpu_custom_call.1} parent=31 // pred_check
          %p337 = pneg %p161
        $region42: #{tpu_custom_call.1} parent=31 // pred_check_branch
          %339 = sbr.rel (%p337) target = $region44
        $region43: #{tpu_custom_call.1} parent=31 // pred_region
          %341 = vsyncadd %s318, 0
          %s342 = scalar_lea.hbm %s5, %s23
          %s344 = sshll.u32 %s320, 4
          %s345 = int_to_ptr.vmem [resolvable:$true] %s344
          %s346 = sshll.u32 %s342, 4
          %s347 = int_to_ptr.hbm [resolvable:$true] %s346
          %349 = dma.vmem_to_hbm [thread:$0]  %s345, 16, %s347, %s318
        $region44: #{tpu_custom_call.1} parent=31 // pred_fallthru
          _
      $region32: #{tpu_custom_call.1} parent=5 // pred_fallthru
        _
      %p350 = scmp.le.s32.totalorder 2, %s18
      // Predicated region
      $region45: #{tpu_custom_call.1} parent=5 // pred_check
        %p351 = pneg %p350
      $region46: #{tpu_custom_call.1} parent=5 // pred_check_branch
        %353 = sbr.rel (%p351) target = $region48
      $region47: #{tpu_custom_call.1} parent=5 // pred_region
        %s354 = ssub.s32 %s18, 2
        // Predicated region
        $region49: #{tpu_custom_call.1} parent=47 // pred_check
          %p355 = pneg %p115
        $region50: #{tpu_custom_call.1} parent=47 // pred_check_branch
          %357 = sbr.rel (%p355) target = $region52
        $region51: #{tpu_custom_call.1} parent=47 // pred_region
          %p358 = scmp.lt.s32.totalorder %s24, 1
          %s359 = scalar_select %p358, %s24, 1
          %s360 = smul.addr %s359, 8
          %s361 = scalar_lea.vmem %s3, %s360
        $region52: #{tpu_custom_call.1} parent=47 // pred_fallthru
          _
        // Predicated region
        $region53: #{tpu_custom_call.1} parent=47 // pred_check
          %p362 = pneg %p141
        $region54: #{tpu_custom_call.1} parent=47 // pred_check_branch
          %364 = sbr.rel (%p362) target = $region56
        $region55: #{tpu_custom_call.1} parent=47 // pred_region
          %s365 = sand.u32 %s126, 1
          %s366 = scalar_lea.sflag [#allocation3], %s365
          %s367 = sand.u32 %s126, 1
          %s368 = scalar_lea.vmem [#allocation2], %s367
          %370 = dma.done %s366, 16
        $region56: #{tpu_custom_call.1} parent=47 // pred_fallthru
          _
        // Predicated region
        $region57: #{tpu_custom_call.1} parent=47 // pred_check
          %p371 = pneg %p167
        $region58: #{tpu_custom_call.1} parent=47 // pred_check_branch
          %373 = sbr.rel (%p371) target = $region60
        $region59: #{tpu_custom_call.1} parent=47 // pred_region
          %s374 = sand.u32 %s152, 1
          %s375 = scalar_lea.sflag [#allocation5], %s374
          %s376 = sand.u32 %s152, 1
          %s377 = scalar_lea.vmem [#allocation4], %s376
          %379 = dma.done %s375, 16
        $region60: #{tpu_custom_call.1} parent=47 // pred_fallthru
          _
      $region48: #{tpu_custom_call.1} parent=5 // pred_fallthru
        _
    $region6: #{tpu_custom_call.1} parent=1 // loop_footer
      %s22 = sadd.s32 1, %s18
    $region7: #{tpu_custom_call.1} parent=1 // loop_footer_branch
      %17 = sbr.rel target = $region3
    $region8: #{tpu_custom_call.1} parent=1 // loop_exit
      _
    %380 = vsyncpa [#allocation3], 1
    %s381 = scalar_lea.sflag [#allocation3], 1
    %382 = vsyncpa %s381, 1
    %383 = vsyncpa [#allocation5], 1
    %s384 = scalar_lea.sflag [#allocation5], 1
    %385 = vsyncpa %s384, 1

</llo_original>
